<compile_context>
chip_gen: v5e
topology: v5e:2x2
jax: 0.10.0
libtpu: 0.0.40
codegen_flags: <defaults>
</compile_context>

<pallas_src>
import numpy as np

import jax
import jax.numpy as jnp
from jax.experimental import pallas as pl
from jax.experimental.pallas import tpu as pltpu


def _choose_batch_tile(B, max_tb, bytes_per_image):
    """Largest divisor of B that is <= max_tb, keeps the double-buffered input block
    small (safe on v7x's 64 MiB VMEM), and leaves >= 2 grid steps when possible so
    both v7x TensorCores get work."""
    budget = 8 * 1024 * 1024  # per-input double-buffer budget
    cap = max(1, min(max_tb, budget // max(1, 2 * bytes_per_image)))
    tb = 1
    for d in range(1, min(B, cap) + 1):
        if B % d == 0:
            tb = d
    if B // tb < 2 and B > 1:
        for d in range(tb - 1, 0, -1):
            if B % d == 0 and B // d >= 2:
                tb = d
                break
    return tb


def _pred_head_kernel(x_ref, w1t_ref, b1_ref, w2t_ref, post_ref, out_ref):
    """Fused 1x1-conv head in NCHW layout.

    x_ref    : (tb, Din, HW) f32   activations (cast to bf16 in VMEM)
    w1t_ref  : (Dh, Din)     bf16  first conv weight, transposed, resident
    b1_ref   : (Dh, 1)       f32
    w2t_ref  : (Dout, Dh)    bf16  second conv weight, transposed, resident
    post_ref : (3, Dout, 1)  f32   [b2, sigmoid-channel mask, per-channel -0.5 offset]
    out_ref  : (tb, Dout, HW) f32  NCHW-ordered output
    """
    w1t = w1t_ref[...]
    w2t = w2t_ref[...]
    b1 = b1_ref[...]            # (Dh, 1)
    b2 = post_ref[0]            # (Dout, 1)
    sig_mask = post_ref[1]      # 1.0 where channel gets a sigmoid
    chan_off = post_ref[2]      # -0.5 on x/y offset channels, 0 elsewhere

    for b in range(x_ref.shape[0]):
        x = x_ref[b].astype(w1t.dtype)                                  # (Din, HW) -> bf16
        h = jnp.dot(w1t, x, preferred_element_type=jnp.float32) + b1    # (Dh, HW) f32
        # LeakyReLU (PyTorch default negative_slope = 0.01), f32 on the VPU.
        h = jnp.where(h > 0, h, jnp.float32(0.01) * h)
        o = jnp.dot(w2t, h.astype(w2t.dtype),
                    preferred_element_type=jnp.float32) + b2            # (Dout, HW) f32
        # Channel-wise post-processing:
        #   c%5==0 (conf)      -> sigmoid
        #   c%5 in {1,2} (x/y) -> sigmoid - 0.5
        #   else               -> raw
        sig = jax.nn.sigmoid(o)                                         # EUP slot
        o = o + sig_mask * (sig - o) + chan_off
        out_ref[b] = o.astype(out_ref.dtype)


def init_params(key, in_dim, hidden_dim, num_anchors, num_classes, dtype=jnp.float32):
    """Deterministic synthetic parameters (shapes match nn.Conv2d 1x1 layers)."""
    out_dim = 5 * num_anchors + num_classes
    k1, k2, k3, k4 = jax.random.split(key, 4)
    # Stored as (in, out) matrices == torch Conv2d weight (out, in, 1, 1) transposed.
    w1 = jax.random.normal(k1, (in_dim, hidden_dim), dtype) * (1.0 / jnp.sqrt(in_dim))
    b1 = jax.random.normal(k2, (hidden_dim,), dtype) * 0.01
    w2 = jax.random.normal(k3, (hidden_dim, out_dim), dtype) * (1.0 / jnp.sqrt(hidden_dim))
    b2 = jax.random.normal(k4, (out_dim,), dtype) * 0.01
    return w1, b1, w2, b2


def _split_outputs(out, A, C, pos_anchor_idx=None, neg_anchor_idx=None):
    """Slice the NCHW head output into conf / offsets / class scores (plain-JAX glue),
    mirroring PredictionNetwork.forward's train/inference paths."""
    B, Dout, H, W = out.shape
    conf_scores = out[:, 0 : 5 * A : 5, :, :]                    # (B, A, H, W), sigmoided
    bboxes = out[:, 0 : 5 * A, :, :].reshape(B, A, 5, H, W)
    offsets = bboxes[:, :, 1:, :, :]                             # (B, A, 4, H, W)
    class_scores = out[:, 5 * A :, :, :]                         # (B, C, H, W)

    if pos_anchor_idx is not None and neg_anchor_idx is not None:
        flat_conf = conf_scores.reshape(-1)
        conf_scores = jnp.concatenate(
            [flat_conf[pos_anchor_idx], flat_conf[neg_anchor_idx]], axis=0
        ).reshape(-1, 1)
        # _extract_anchor_data: (B, A, 4, H, W) -> (B*A*H*W, 4) -> gather
        off_flat = jnp.transpose(offsets, (0, 1, 3, 4, 2)).reshape(-1, 4)
        offsets = off_flat[pos_anchor_idx]
        # _extract_class_scores: (B, C, H, W) -> (B, A, H, W, C) -> gather
        cs = jnp.transpose(class_scores, (0, 2, 3, 1)).reshape(B, 1, H, W, C)
        cs = jnp.broadcast_to(cs, (B, A, H, W, C)).reshape(B * A * H * W, C)
        class_scores = cs[pos_anchor_idx]

    return conf_scores, offsets, class_scores


def prediction_network_forward(
    features,
    params,
    num_anchors,
    num_classes,
    pos_anchor_idx=None,
    neg_anchor_idx=None,
    batch_tile=8,
    compute_dtype=jnp.bfloat16,
):
    """Forward pass. features: (B, in_dim, H, W) float32 (NCHW, like PyTorch)."""
    w1, b1, w2, b2 = params
    B, Din, H, W = features.shape
    A, C = num_anchors, num_classes
    Dh = w1.shape[1]
    Dout = 5 * A + C
    HW = H * W

    # NCHW -> (B, Din, HW): metadata-only reshape, NO transpose, NO cast pass.
    x = features.reshape(B, Din, HW)

    # Resident transposed weights (bf16) and biases / per-channel post-proc vectors.
    w1t = jnp.asarray(w1.T, compute_dtype)                     # (Dh, Din)
    w2t = jnp.asarray(w2.T, compute_dtype)                     # (Dout, Dh)
    b1c = b1.astype(jnp.float32).reshape(Dh, 1)

    ch = np.arange(Dout)
    in_anchor = ch < 5 * A
    mod5 = ch % 5
    sig_mask = (in_anchor & (mod5 <= 2)).astype(np.float32)
    chan_off = np.where(in_anchor & ((mod5 == 1) | (mod5 == 2)), -0.5, 0.0).astype(np.float32)
    post = jnp.stack(
        [b2.astype(jnp.float32), jnp.asarray(sig_mask), jnp.asarray(chan_off)], axis=0
    ).reshape(3, Dout, 1)

    tb = _choose_batch_tile(B, batch_tile, Din * HW * 4)
    grid = (B // tb,)

    cost = pl.CostEstimate(
        flops=2 * B * HW * (Din * Dh + Dh * Dout),
        transcendentals=B * HW * Dout,
        bytes_accessed=(
            B * Din * HW * 4                                            # f32 activations in
            + (Dh * Din + Dout * Dh) * np.dtype(compute_dtype).itemsize # resident weights
            + (Dh + 3 * Dout) * 4                                       # biases / masks
            + B * Dout * HW * 4                                         # f32 output
        ),
    )

    out = pl.pallas_call(
        _pred_head_kernel,
        out_shape=jax.ShapeDtypeStruct((B, Dout, HW), jnp.float32),
        grid_spec=pltpu.PrefetchScalarGridSpec(
            num_scalar_prefetch=0,
            grid=grid,
            in_specs=[
                pl.BlockSpec((tb, Din, HW), lambda i: (i, 0, 0)),   # activations tile (f32)
                pl.BlockSpec((Dh, Din), lambda i: (0, 0)),          # w1ᵀ (resident)
                pl.BlockSpec((Dh, 1), lambda i: (0, 0)),            # b1
                pl.BlockSpec((Dout, Dh), lambda i: (0, 0)),         # w2ᵀ (resident)
                pl.BlockSpec((3, Dout, 1), lambda i: (0, 0, 0)),    # [b2, sig_mask, chan_off]
            ],
            out_specs=pl.BlockSpec((tb, Dout, HW), lambda i: (i, 0, 0)),
        ),
        compiler_params=pltpu.CompilerParams(dimension_semantics=("parallel",)),
        cost_estimate=cost,
    )(x, w1t, b1c, w2t, post)

    # (B, Dout, HW) is already NCHW-ordered: reshape only (free).
    out = out.reshape(B, Dout, H, W)
    return _split_outputs(out, A, C, pos_anchor_idx, neg_anchor_idx)


def _reference_forward(
    features, params, num_anchors, num_classes,
    pos_anchor_idx=None, neg_anchor_idx=None, compute_dtype=jnp.bfloat16,
):
    """Plain-JAX reference (matched matmul precision) mirroring the PyTorch module."""
    w1, b1, w2, b2 = params
    B, Din, H, W = features.shape
    A, C = num_anchors, num_classes
    Dout = 5 * A + C
    x = features.reshape(B, Din, H * W).astype(compute_dtype)
    h = jnp.einsum("dk,bkn->bdn", w1.T.astype(compute_dtype), x,
                   preferred_element_type=jnp.float32)
    h = h + b1.astype(jnp.float32)[None, :, None]
    h = jnp.where(h > 0, h, 0.01 * h)
    o = jnp.einsum("dk,bkn->bdn", w2.T.astype(compute_dtype), h.astype(compute_dtype),
                   preferred_element_type=jnp.float32)
    o = o + b2.astype(jnp.float32)[None, :, None]
    ch = jnp.arange(Dout)
    in_anchor = ch < 5 * A
    mod5 = ch % 5
    sig = jax.nn.sigmoid(o)
    o = jnp.where((in_anchor & (mod5 <= 2))[None, :, None], sig, o)
    o = o + jnp.where(in_anchor & ((mod5 == 1) | (mod5 == 2)), -0.5, 0.0)[None, :, None]
    out = o.reshape(B, Dout, H, W).astype(features.dtype)
    return _split_outputs(out, A, C, pos_anchor_idx, neg_anchor_idx)


if __name__ == "__main__":
    # Small shapes consistent with the module: features (B, in_dim, 7, 7).
    B, in_dim, H, W = 2, 64, 7, 7
    hidden_dim, num_anchors, num_classes = 128, 9, 20

    key = jax.random.PRNGKey(0)
    k_feat, k_params, k_idx = jax.random.split(key, 3)
    features = jax.random.normal(k_feat, (B, in_dim, H, W), jnp.float32)
    params = init_params(k_params, in_dim, hidden_dim, num_anchors, num_classes)

    # Inference path (all anchors).
    conf, offs, cls = prediction_network_forward(features, params, num_anchors, num_classes)
    jax.block_until_ready((conf, offs, cls))
    assert conf.shape == (B, num_anchors, H, W)
    assert offs.shape == (B, num_anchors, 4, H, W)
    assert cls.shape == (B, num_classes, H, W)
    assert bool(jnp.all((conf >= 0.0) & (conf <= 1.0)))        # conf scores are sigmoided
    assert bool(jnp.all(jnp.abs(offs[:, :, 0:2]) <= 0.5))      # x/y offsets in [-0.5, 0.5]

    conf_r, offs_r, cls_r = _reference_forward(features, params, num_anchors, num_classes)
    np.testing.assert_allclose(np.asarray(conf), np.asarray(conf_r), atol=2e-3, rtol=2e-3)
    np.testing.assert_allclose(np.asarray(offs), np.asarray(offs_r), atol=2e-3, rtol=2e-3)
    np.testing.assert_allclose(np.asarray(cls), np.asarray(cls_r), atol=2e-3, rtol=2e-3)

    # Training path (extract positive / negative anchor predictions).
    M = 6
    total_anchors = B * num_anchors * H * W
    pos_idx = jax.random.randint(k_idx, (M,), 0, total_anchors, dtype=jnp.int32)
    neg_idx = (pos_idx + 7) % total_anchors
    conf_t, offs_t, cls_t = prediction_network_forward(
        features, params, num_anchors, num_classes, pos_idx, neg_idx
    )
    jax.block_until_ready((conf_t, offs_t, cls_t))
    assert conf_t.shape == (2 * M, 1)
    assert offs_t.shape == (M, 4)
    assert cls_t.shape == (M, num_classes)

    conf_tr, offs_tr, cls_tr = _reference_forward(
        features, params, num_anchors, num_classes, pos_idx, neg_idx
    )
    np.testing.assert_allclose(np.asarray(conf_t), np.asarray(conf_tr), atol=2e-3, rtol=2e-3)
    np.testing.assert_allclose(np.asarray(offs_t), np.asarray(offs_tr), atol=2e-3, rtol=2e-3)
    np.testing.assert_allclose(np.asarray(cls_t), np.asarray(cls_tr), atol=2e-3, rtol=2e-3)

    print("KERNEL_OK")
</pallas_src>

<mosaic_0001>
module attributes {stable_mosaic.version = 11 : i64} {
  func.func @_pred_head_kernel(%arg0: i32, %arg1: memref<1x64x49xf32, #tpu.memory_space<vmem>>, %arg2: memref<128x64xbf16, #tpu.memory_space<vmem>>, %arg3: memref<128x1xf32, #tpu.memory_space<vmem>>, %arg4: memref<65x128xbf16, #tpu.memory_space<vmem>>, %arg5: memref<3x65x1xf32, #tpu.memory_space<vmem>>, %arg6: memref<1x65x49xf32, #tpu.memory_space<vmem>>) attributes {dimension_semantics = [#tpu.dimension_semantics<parallel>], iteration_bounds = array<i64: 2>, scalar_prefetch = 0 : i64, scratch_operands = 0 : i64, tpu.core_type = #tpu.core_type<tc>, window_params = [{transform_indices = @transform_0, window_bounds = array<i64: 1, 64, 49>}, {pipeline_mode = #tpu.pipeline_mode<synchronous>, transform_indices = @transform_1, window_bounds = array<i64: 128, 64>}, {pipeline_mode = #tpu.pipeline_mode<synchronous>, transform_indices = @transform_2, window_bounds = array<i64: 128, 1>}, {pipeline_mode = #tpu.pipeline_mode<synchronous>, transform_indices = @transform_3, window_bounds = array<i64: 65, 128>}, {pipeline_mode = #tpu.pipeline_mode<synchronous>, transform_indices = @transform_4, window_bounds = array<i64: 3, 65, 1>}, {transform_indices = @transform_5, window_bounds = array<i64: 1, 65, 49>}]} {
    %c0 = arith.constant 0 : index
    %c0_0 = arith.constant 0 : index
    %0 = vector.load %arg2[%c0, %c0_0] : memref<128x64xbf16, #tpu.memory_space<vmem>>, vector<128x64xbf16>
    %c0_1 = arith.constant 0 : index
    %c0_2 = arith.constant 0 : index
    %1 = vector.load %arg4[%c0_1, %c0_2] : memref<65x128xbf16, #tpu.memory_space<vmem>>, vector<65x128xbf16>
    %c0_3 = arith.constant 0 : index
    %c0_4 = arith.constant 0 : index
    %2 = vector.load %arg3[%c0_3, %c0_4] : memref<128x1xf32, #tpu.memory_space<vmem>>, vector<128x1xf32>
    %c0_5 = arith.constant 0 : index
    %c0_6 = arith.constant 0 : index
    %c0_7 = arith.constant 0 : index
    %3 = vector.load %arg5[%c0_5, %c0_6, %c0_7] : memref<3x65x1xf32, #tpu.memory_space<vmem>>, vector<1x65x1xf32>
    %4 = vector.shape_cast %3 : vector<1x65x1xf32> to vector<65x1xf32>
    %c1 = arith.constant 1 : index
    %c0_8 = arith.constant 0 : index
    %c0_9 = arith.constant 0 : index
    %5 = vector.load %arg5[%c1, %c0_8, %c0_9] : memref<3x65x1xf32, #tpu.memory_space<vmem>>, vector<1x65x1xf32>
    %6 = vector.shape_cast %5 : vector<1x65x1xf32> to vector<65x1xf32>
    %c2 = arith.constant 2 : index
    %c0_10 = arith.constant 0 : index
    %c0_11 = arith.constant 0 : index
    %7 = vector.load %arg5[%c2, %c0_10, %c0_11] : memref<3x65x1xf32, #tpu.memory_space<vmem>>, vector<1x65x1xf32>
    %8 = vector.shape_cast %7 : vector<1x65x1xf32> to vector<65x1xf32>
    %c0_12 = arith.constant 0 : index
    %c0_13 = arith.constant 0 : index
    %c0_14 = arith.constant 0 : index
    %9 = vector.load %arg1[%c0_12, %c0_13, %c0_14] : memref<1x64x49xf32, #tpu.memory_space<vmem>>, vector<1x64x49xf32>
    %10 = vector.shape_cast %9 : vector<1x64x49xf32> to vector<64x49xf32>
    %11 = arith.truncf %10 : vector<64x49xf32> to vector<64x49xbf16>
    %cst = arith.constant dense<0.000000e+00> : vector<128x49xf32>
    %12 = tpu.matmul %0, %11, %cst {dimension_numbers = #tpu.dot_dimension_numbers<[1], [0], [0], [1], [0, 0, 1, 1], [], []>} : vector<128x64xbf16>, vector<64x49xbf16>, vector<128x49xf32> -> vector<128x49xf32>
    %13 = vector.broadcast %2 : vector<128x1xf32> to vector<128x49xf32>
    %14 = arith.addf %12, %13 : vector<128x49xf32>
    %cst_15 = arith.constant 0.000000e+00 : f32
    %15 = vector.broadcast %cst_15 : f32 to vector<128x49xf32>
    %16 = arith.cmpf ogt, %14, %15 : vector<128x49xf32>
    %cst_16 = arith.constant 0.00999999977 : f32
    %17 = vector.broadcast %cst_16 : f32 to vector<128x49xf32>
    %18 = arith.mulf %17, %14 : vector<128x49xf32>
    %19 = arith.select %16, %14, %18 : vector<128x49xi1>, vector<128x49xf32>
    %20 = arith.truncf %19 : vector<128x49xf32> to vector<128x49xbf16>
    %cst_17 = arith.constant dense<0.000000e+00> : vector<65x49xf32>
    %21 = tpu.matmul %1, %20, %cst_17 {dimension_numbers = #tpu.dot_dimension_numbers<[1], [0], [0], [1], [0, 0, 1, 1], [], []>} : vector<65x128xbf16>, vector<128x49xbf16>, vector<65x49xf32> -> vector<65x49xf32>
    %22 = vector.broadcast %4 : vector<65x1xf32> to vector<65x49xf32>
    %23 = arith.addf %21, %22 : vector<65x49xf32>
    %24 = arith.negf %23 : vector<65x49xf32>
    %25 = math.exp %24 : vector<65x49xf32>
    %cst_18 = arith.constant 1.000000e+00 : f32
    %26 = vector.broadcast %cst_18 : f32 to vector<65x49xf32>
    %27 = arith.addf %26, %25 : vector<65x49xf32>
    %28 = arith.divf %26, %27 : vector<65x49xf32>
    %29 = arith.subf %28, %23 : vector<65x49xf32>
    %30 = vector.broadcast %6 : vector<65x1xf32> to vector<65x49xf32>
    %31 = arith.mulf %30, %29 : vector<65x49xf32>
    %32 = arith.addf %23, %31 : vector<65x49xf32>
    %33 = vector.broadcast %8 : vector<65x1xf32> to vector<65x49xf32>
    %34 = arith.addf %32, %33 : vector<65x49xf32>
    %c0_19 = arith.constant 0 : index
    %c0_20 = arith.constant 0 : index
    %c0_21 = arith.constant 0 : index
    %35 = vector.load %arg6[%c0_19, %c0_20, %c0_21] : memref<1x65x49xf32, #tpu.memory_space<vmem>>, vector<1x65x49xf32>
    %36 = vector.shape_cast %35 : vector<1x65x49xf32> to vector<65x49xf32>
    %37 = vector.shape_cast %34 : vector<65x49xf32> to vector<1x65x49xf32>
    tpu.vector_store %arg6[%c0_19, %c0_20, %c0_21], %37 {strides = array<i32>} : memref<1x65x49xf32, #tpu.memory_space<vmem>>, vector<1x65x49xf32>,
    return
  }
  func.func @transform_0(%arg0: i32) -> (i32, i32, i32) {
    %c0_i32 = arith.constant 0 : i32
    %c0_i32_0 = arith.constant 0 : i32
    %c0_i32_1 = arith.constant 0 : i32
    return %arg0, %c0_i32, %c0_i32_0 : i32, i32, i32
  }
  func.func @transform_1(%arg0: i32) -> (i32, i32) {
    %c0_i32 = arith.constant 0 : i32
    %c0_i32_0 = arith.constant 0 : i32
    %c0_i32_1 = arith.constant 0 : i32
    return %c0_i32, %c0_i32_0 : i32, i32
  }
  func.func @transform_2(%arg0: i32) -> (i32, i32) {
    %c0_i32 = arith.constant 0 : i32
    %c0_i32_0 = arith.constant 0 : i32
    %c0_i32_1 = arith.constant 0 : i32
    return %c0_i32, %c0_i32_0 : i32, i32
  }
  func.func @transform_3(%arg0: i32) -> (i32, i32) {
    %c0_i32 = arith.constant 0 : i32
    %c0_i32_0 = arith.constant 0 : i32
    %c0_i32_1 = arith.constant 0 : i32
    return %c0_i32, %c0_i32_0 : i32, i32
  }
  func.func @transform_4(%arg0: i32) -> (i32, i32, i32) {
    %c0_i32 = arith.constant 0 : i32
    %c0_i32_0 = arith.constant 0 : i32
    %c0_i32_1 = arith.constant 0 : i32
    %c0_i32_2 = arith.constant 0 : i32
    return %c0_i32, %c0_i32_0, %c0_i32_1 : i32, i32, i32
  }
  func.func @transform_5(%arg0: i32) -> (i32, i32, i32) {
    %c0_i32 = arith.constant 0 : i32
    %c0_i32_0 = arith.constant 0 : i32
    %c0_i32_1 = arith.constant 0 : i32
    return %arg0, %c0_i32, %c0_i32_0 : i32, i32, i32
  }
}

</mosaic_0001>

<llo_original>
// kernel: tpu_custom_call.1
$region0: #{tpu_custom_call.1}
  #allocation0 [shape = 'u32[]', space=smem, size = 0x4, offset = 0x4, fixed_abs, tag = 'smem constant byte address 0x4 - core index']
  #allocation1 [shape = 'u32[72,128]{1,0:T(1,128)}', space=vmem, size = 0x9000, scoped, tag = 'internal scratch']
  %s0 = inlined_call_operand.vmem [shape: f32[2,64,49], index: 0, kind: input, shape index: {}]
  %s1 = inlined_call_operand.vmem [shape: bf16[128,64], index: 1, kind: input, shape index: {}]
  %s2 = inlined_call_operand.vmem [shape: f32[128,1], index: 2, kind: input, shape index: {}]
  %s3 = inlined_call_operand.vmem [shape: bf16[65,128], index: 3, kind: input, shape index: {}]
  %s4 = inlined_call_operand.vmem [shape: f32[3,65,1], index: 4, kind: input, shape index: {}]
  %s5 = inlined_call_operand.vmem [shape: f32[2,65,49], index: 5, kind: output, shape index: {}]
  %s6 = sld [smem:[#allocation0]]
  $region53: #{tpu_custom_call.1} parent=0
    _
  %s8 = ssub.s32 1, %s6
  %s9 = scalar_select 0, %s8, %s6
  loop: start=0, step=1, limit=4
  $region2: #{tpu_custom_call.1} parent=0 // loop_pre_header
    _
  $region3: #{tpu_custom_call.1} parent=0 // loop_header
    %s11 = sphi 0, %s15
    %p12 = scmp.ge.s32.totalorder %s11, 4
    %s21 = sphi 0, %s23
    %s24 = sphi 0, %s21
    %s25 = sphi 0, %s24
    %s41 = sphi 0, %s25
    %s45 = sphi 0, %s45
    %s47 = sphi 0, %s45
    %s48 = sphi 0, %s47
    %s62 = sphi 0, %s48
    %s66 = sphi 0, %s66
    %s68 = sphi 0, %s66
    %s69 = sphi 0, %s68
    %s83 = sphi 0, %s69
    %s87 = sphi 0, %s87
    %s89 = sphi 0, %s87
    %s90 = sphi 0, %s89
    %s104 = sphi 0, %s90
    %s108 = sphi 0, %s108
    %s110 = sphi 0, %s108
    %s111 = sphi 0, %s110
    %s125 = sphi 0, %s111
    %s131 = sphi 0, %s133
    %s134 = sphi 0, %s131
    %s135 = sphi 0, %s134
    %s151 = sphi 0, %s135
  $region4: #{tpu_custom_call.1} parent=0 // loop_header_branch
    %14 = sbr.rel (%p12) target = $region8
  $region5: #{tpu_custom_call.1} parent=0 // loop_body
    %s16 = ssub.s32 %s11, 1
    %s17 = ssub.s32 %s11, 2
    %s18 = sadd.s32 %s11, 1
    %s19 = ssub.s32 %s11, %s18
    %p20 = scmp.eq.s32.totalorder %s19, 0
    %s22 = sadd.s32 %s21, 1
    %s23 = scalar_select %p20, %s21, %s22
    %p26 = pneg %p20
    %p27 = scmp.eq.s32.totalorder %s11, 1
    %p28 = por %p26, %p27
    %p29 = scmp.ne.s32.totalorder %s21, %s24
    %p30 = scmp.eq.s32.totalorder %s11, 0
    %p31 = por %p29, %p30
    %p32 = scmp.ne.s32.totalorder %s21, %s24
    %p33 = scmp.eq.s32.totalorder %s16, 1
    %p34 = por %p32, %p33
    %p35 = scmp.ne.s32.totalorder %s24, %s25
    %p36 = scmp.eq.s32.totalorder %s16, 0
    %p37 = por %p35, %p36
    %p38 = scmp.ne.s32.totalorder %s24, %s25
    %p39 = scmp.eq.s32.totalorder %s17, 1
    %p40 = por %p38, %p39
    %p42 = scmp.ne.s32.totalorder %s25, %s41
    %p43 = scmp.eq.s32.totalorder %s17, 0
    %p44 = por %p42, %p43
    %s46 = sadd.s32 %s45, 1
    %p49 = scmp.eq.s32.totalorder %s11, 1
    %p50 = scmp.ne.s32.totalorder %s45, %s47
    %p51 = scmp.eq.s32.totalorder %s11, 0
    %p52 = por %p50, %p51
    %p53 = scmp.ne.s32.totalorder %s45, %s47
    %p54 = scmp.eq.s32.totalorder %s16, 1
    %p55 = por %p53, %p54
    %p56 = scmp.ne.s32.totalorder %s47, %s48
    %p57 = scmp.eq.s32.totalorder %s16, 0
    %p58 = por %p56, %p57
    %p59 = scmp.ne.s32.totalorder %s47, %s48
    %p60 = scmp.eq.s32.totalorder %s17, 1
    %p61 = por %p59, %p60
    %p63 = scmp.ne.s32.totalorder %s48, %s62
    %p64 = scmp.eq.s32.totalorder %s17, 0
    %p65 = por %p63, %p64
    %s67 = sadd.s32 %s66, 1
    %p70 = scmp.eq.s32.totalorder %s11, 1
    %p71 = scmp.ne.s32.totalorder %s66, %s68
    %p72 = scmp.eq.s32.totalorder %s11, 0
    %p73 = por %p71, %p72
    %p74 = scmp.ne.s32.totalorder %s66, %s68
    %p75 = scmp.eq.s32.totalorder %s16, 1
    %p76 = por %p74, %p75
    %p77 = scmp.ne.s32.totalorder %s68, %s69
    %p78 = scmp.eq.s32.totalorder %s16, 0
    %p79 = por %p77, %p78
    %p80 = scmp.ne.s32.totalorder %s68, %s69
    %p81 = scmp.eq.s32.totalorder %s17, 1
    %p82 = por %p80, %p81
    %p84 = scmp.ne.s32.totalorder %s69, %s83
    %p85 = scmp.eq.s32.totalorder %s17, 0
    %p86 = por %p84, %p85
    %s88 = sadd.s32 %s87, 1
    %p91 = scmp.eq.s32.totalorder %s11, 1
    %p92 = scmp.ne.s32.totalorder %s87, %s89
    %p93 = scmp.eq.s32.totalorder %s11, 0
    %p94 = por %p92, %p93
    %p95 = scmp.ne.s32.totalorder %s87, %s89
    %p96 = scmp.eq.s32.totalorder %s16, 1
    %p97 = por %p95, %p96
    %p98 = scmp.ne.s32.totalorder %s89, %s90
    %p99 = scmp.eq.s32.totalorder %s16, 0
    %p100 = por %p98, %p99
    %p101 = scmp.ne.s32.totalorder %s89, %s90
    %p102 = scmp.eq.s32.totalorder %s17, 1
    %p103 = por %p101, %p102
    %p105 = scmp.ne.s32.totalorder %s90, %s104
    %p106 = scmp.eq.s32.totalorder %s17, 0
    %p107 = por %p105, %p106
    %s109 = sadd.s32 %s108, 1
    %p112 = scmp.eq.s32.totalorder %s11, 1
    %p113 = scmp.ne.s32.totalorder %s108, %s110
    %p114 = scmp.eq.s32.totalorder %s11, 0
    %p115 = por %p113, %p114
    %p116 = scmp.ne.s32.totalorder %s108, %s110
    %p117 = scmp.eq.s32.totalorder %s16, 1
    %p118 = por %p116, %p117
    %p119 = scmp.ne.s32.totalorder %s110, %s111
    %p120 = scmp.eq.s32.totalorder %s16, 0
    %p121 = por %p119, %p120
    %p122 = scmp.ne.s32.totalorder %s110, %s111
    %p123 = scmp.eq.s32.totalorder %s17, 1
    %p124 = por %p122, %p123
    %p126 = scmp.ne.s32.totalorder %s111, %s125
    %p127 = scmp.eq.s32.totalorder %s17, 0
    %p128 = por %p126, %p127
    %s129 = ssub.s32 %s11, %s18
    %p130 = scmp.eq.s32.totalorder %s129, 0
    %s132 = sadd.s32 %s131, 1
    %s133 = scalar_select %p130, %s131, %s132
    %p136 = pneg %p130
    %p137 = scmp.eq.s32.totalorder %s11, 1
    %p138 = por %p136, %p137
    %p139 = scmp.ne.s32.totalorder %s131, %s134
    %p140 = scmp.eq.s32.totalorder %s11, 0
    %p141 = por %p139, %p140
    %p142 = scmp.ne.s32.totalorder %s131, %s134
    %p143 = scmp.eq.s32.totalorder %s16, 1
    %p144 = por %p142, %p143
    %p145 = scmp.ne.s32.totalorder %s134, %s135
    %p146 = scmp.eq.s32.totalorder %s16, 0
    %p147 = por %p145, %p146
    %p148 = scmp.ne.s32.totalorder %s134, %s135
    %p149 = scmp.eq.s32.totalorder %s17, 1
    %p150 = por %p148, %p149
    %p152 = scmp.ne.s32.totalorder %s135, %s151
    %p153 = scmp.eq.s32.totalorder %s17, 0
    %p154 = por %p152, %p153
    %p155 = scmp.le.s32.totalorder 1, %s11
    %p156 = scmp.lt.s32.totalorder %s11, 3
    %p157 = pnand %p155, %p156
    %p158 = pneg %p157
    // Predicated region
    $region9: #{tpu_custom_call.1} parent=5 // pred_check
      _
    $region10: #{tpu_custom_call.1} parent=5 // pred_check_branch
      %160 = sbr.rel (%p157) target = $region12
    $region11: #{tpu_custom_call.1} parent=5 // pred_region
      %s161 = ssub.s32 %s11, 1
      // Predicated region
      $region13: #{tpu_custom_call.1} parent=11 // pred_check
        %p162 = pneg %p58
      $region14: #{tpu_custom_call.1} parent=11 // pred_check_branch
        %164 = sbr.rel (%p162) target = $region16
      $region15: #{tpu_custom_call.1} parent=11 // pred_region
        _
      $region16: #{tpu_custom_call.1} parent=11 // pred_fallthru
        _
      // Predicated region
      $region17: #{tpu_custom_call.1} parent=11 // pred_check
        %p165 = pneg %p79
      $region18: #{tpu_custom_call.1} parent=11 // pred_check_branch
        %167 = sbr.rel (%p165) target = $region20
      $region19: #{tpu_custom_call.1} parent=11 // pred_region
        _
      $region20: #{tpu_custom_call.1} parent=11 // pred_fallthru
        _
      // Predicated region
      $region21: #{tpu_custom_call.1} parent=11 // pred_check
        %p168 = pneg %p100
      $region22: #{tpu_custom_call.1} parent=11 // pred_check_branch
        %170 = sbr.rel (%p168) target = $region24
      $region23: #{tpu_custom_call.1} parent=11 // pred_region
        _
      $region24: #{tpu_custom_call.1} parent=11 // pred_fallthru
        _
      // Predicated region
      $region25: #{tpu_custom_call.1} parent=11 // pred_check
        %p171 = pneg %p121
      $region26: #{tpu_custom_call.1} parent=11 // pred_check_branch
        %173 = sbr.rel (%p171) target = $region28
      $region27: #{tpu_custom_call.1} parent=11 // pred_region
        _
      $region28: #{tpu_custom_call.1} parent=11 // pred_fallthru
        _
    $region12: #{tpu_custom_call.1} parent=5 // pred_fallthru
      _
    %p174 = scmp.lt.s32.totalorder %s11, 2
    // Predicated region
    $region29: #{tpu_custom_call.1} parent=5 // pred_check
      %p175 = pneg %p174
    $region30: #{tpu_custom_call.1} parent=5 // pred_check_branch
      %177 = sbr.rel (%p175) target = $region32
    $region31: #{tpu_custom_call.1} parent=5 // pred_region
      // Predicated region
      $region33: #{tpu_custom_call.1} parent=31 // pred_check
        %p178 = pneg %p31
      $region34: #{tpu_custom_call.1} parent=31 // pred_check_branch
        %180 = sbr.rel (%p178) target = $region36
      $region35: #{tpu_custom_call.1} parent=31 // pred_region
        %p181 = scmp.lt.s32.totalorder %s11, 1
        %s182 = scalar_select %p181, %s11, 1
        %s183 = smul.addr %s182, 8
        %s184 = smul.addr %s183, 8
        %s185 = scalar_lea.vmem %s0, %s184
      $region36: #{tpu_custom_call.1} parent=31 // pred_fallthru
        _
    $region32: #{tpu_custom_call.1} parent=5 // pred_fallthru
      _
    %p186 = scmp.le.s32.totalorder 1, %s11
    %p187 = scmp.lt.s32.totalorder %s11, 3
    %p188 = pnand %p186, %p187
    %p189 = pneg %p188
    // Predicated region
    $region37: #{tpu_custom_call.1} parent=5 // pred_check
      _
    $region38: #{tpu_custom_call.1} parent=5 // pred_check_branch
      %191 = sbr.rel (%p188) target = $region40
    $region39: #{tpu_custom_call.1} parent=5 // pred_region
      %s192 = ssub.s32 %s11, 1
      %p193 = scmp.lt.s32.totalorder %s16, 1
      %s194 = scalar_select %p193, %s16, 1
      %s195 = smul.addr %s194, 8
      %s196 = smul.addr %s195, 8
      %s197 = scalar_lea.vmem %s0, %s196
      %p198 = pneg %p37
      %p199 = pneg %p34
      %p200 = pneg %p58
      %p201 = pneg %p55
      %p202 = pneg %p79
      %p203 = pneg %p76
      %p204 = pneg %p100
      %p205 = pneg %p97
      %p206 = pneg %p121
      %p207 = pneg %p118
      %p208 = pneg %p147
      %p209 = pneg %p144
      %p210 = scmp.lt.s32.totalorder %s16, 1
      %s211 = scalar_select %p210, %s16, 1
      %s212 = smul.addr %s211, 9
      %s213 = smul.addr %s212, 8
      %s214 = scalar_lea.vmem %s5, %s213
      %p215 = scmp.lt.s32.totalorder %s16, 1
      %s216 = scalar_select %p215, %s16, 1
      %s217 = smul.addr %s216, 8
      %s218 = smul.addr %s217, 8
      %s219 = scalar_lea.vmem %s0, %s218
      %p220 = scmp.lt.s32.totalorder %s16, 1
      %s221 = scalar_select %p220, %s16, 1
      %s222 = smul.addr %s221, 9
      %s223 = smul.addr %s222, 8
      %s224 = scalar_lea.vmem %s5, %s223
      %v226 = vld [vmem:[%s1] sm:$0xf]
      %v227 = vld [vmem:[%s1 + $0x4] sm:$0xf]
      %v228 = vld [vmem:[%s1 + $0x8] sm:$0xf]
      %v229 = vld [vmem:[%s1 + $0xc] sm:$0xf]
      %v230 = vld [vmem:[%s1 + $0x10] sm:$0xf]
      %v231 = vld [vmem:[%s1 + $0x14] sm:$0xf]
      %v232 = vld [vmem:[%s1 + $0x18] sm:$0xf]
      %v233 = vld [vmem:[%s1 + $0x1c] sm:$0xf]
      %v234 = vld [vmem:[%s1 + $0x20] sm:$0xf]
      %v235 = vld [vmem:[%s1 + $0x24] sm:$0xf]
      %v236 = vld [vmem:[%s1 + $0x28] sm:$0xf]
      %v237 = vld [vmem:[%s1 + $0x2c] sm:$0xf]
      %v238 = vld [vmem:[%s1 + $0x30] sm:$0xf]
      %v239 = vld [vmem:[%s1 + $0x34] sm:$0xf]
      %v240 = vld [vmem:[%s1 + $0x38] sm:$0xf]
      %v241 = vld [vmem:[%s1 + $0x3c] sm:$0xf]
      %v242 = vld [vmem:[%s3] sm:$0xf]
      %v243 = vld [vmem:[%s3 + $0x4] sm:$0xf]
      %v244 = vld [vmem:[%s3 + $0x8] sm:$0xf]
      %v245 = vld [vmem:[%s3 + $0xc] sm:$0xf]
      %v246 = vld [vmem:[%s3 + $0x10] sm:$0xf]
      %v247 = vld [vmem:[%s3 + $0x14] sm:$0xf]
      %v248 = vld [vmem:[%s3 + $0x18] sm:$0xf]
      %v249 = vld [vmem:[%s3 + $0x1c] sm:$0xf]
      %v250 = vld [vmem:[%s3 + $0x20] sm:$0x1]
      %v251 = vld [vmem:[%s2] sm:$0xff]
      %v252 = vld [vmem:[%s2 + $0x8] sm:$0xff]
      %v253 = vld [vmem:[%s2 + $0x10] sm:$0xff]
      %v254 = vld [vmem:[%s2 + $0x18] sm:$0xff]
      %v255 = vld [vmem:[%s2 + $0x20] sm:$0xff]
      %v256 = vld [vmem:[%s2 + $0x28] sm:$0xff]
      %v257 = vld [vmem:[%s2 + $0x30] sm:$0xff]
      %v258 = vld [vmem:[%s2 + $0x38] sm:$0xff]
      %v259 = vld [vmem:[%s2 + $0x40] sm:$0xff]
      %v260 = vld [vmem:[%s2 + $0x48] sm:$0xff]
      %v261 = vld [vmem:[%s2 + $0x50] sm:$0xff]
      %v262 = vld [vmem:[%s2 + $0x58] sm:$0xff]
      %v263 = vld [vmem:[%s2 + $0x60] sm:$0xff]
      %v264 = vld [vmem:[%s2 + $0x68] sm:$0xff]
      %v265 = vld [vmem:[%s2 + $0x70] sm:$0xff]
      %v266 = vld [vmem:[%s2 + $0x78] sm:$0xff]
      %v267 = vld [vmem:[%s4] sm:$0xff]
      %v268 = vld [vmem:[%s4 + $0x8] sm:$0xff]
      %v269 = vld [vmem:[%s4 + $0x10] sm:$0xff]
      %v270 = vld [vmem:[%s4 + $0x18] sm:$0xff]
      %v271 = vld [vmem:[%s4 + $0x20] sm:$0xff]
      %v272 = vld [vmem:[%s4 + $0x28] sm:$0xff]
      %v273 = vld [vmem:[%s4 + $0x30] sm:$0xff]
      %v274 = vld [vmem:[%s4 + $0x38] sm:$0xff]
      %v275 = vld [vmem:[%s4 + $0x40] sm:$0x1]
      %s276 = scalar_lea.vmem %s4, 72
      %v277 = vld [vmem:[%s276] sm:$0xff]
      %v278 = vld [vmem:[%s276 + $0x8] sm:$0xff]
      %v279 = vld [vmem:[%s276 + $0x10] sm:$0xff]
      %v280 = vld [vmem:[%s276 + $0x18] sm:$0xff]
      %v281 = vld [vmem:[%s276 + $0x20] sm:$0xff]
      %v282 = vld [vmem:[%s276 + $0x28] sm:$0xff]
      %v283 = vld [vmem:[%s276 + $0x30] sm:$0xff]
      %v284 = vld [vmem:[%s276 + $0x38] sm:$0xff]
      %v285 = vld [vmem:[%s276 + $0x40] sm:$0x1]
      %s286 = scalar_lea.vmem %s4, 144
      %v287 = vld [vmem:[%s286] sm:$0xff]
      %v288 = vld [vmem:[%s286 + $0x8] sm:$0xff]
      %v289 = vld [vmem:[%s286 + $0x10] sm:$0xff]
      %v290 = vld [vmem:[%s286 + $0x18] sm:$0xff]
      %v291 = vld [vmem:[%s286 + $0x20] sm:$0xff]
      %v292 = vld [vmem:[%s286 + $0x28] sm:$0xff]
      %v293 = vld [vmem:[%s286 + $0x30] sm:$0xff]
      %v294 = vld [vmem:[%s286 + $0x38] sm:$0xff]
      %v295 = vld [vmem:[%s286 + $0x40] sm:$0x1]
      %v296 = vld [vmem:[%s219] sm:$0xff]
      %v297 = vld [vmem:[%s219 + $0x8] sm:$0xff]
      %v298 = vld [vmem:[%s219 + $0x10] sm:$0xff]
      %v299 = vld [vmem:[%s219 + $0x18] sm:$0xff]
      %v300 = vld [vmem:[%s219 + $0x20] sm:$0xff]
      %v301 = vld [vmem:[%s219 + $0x28] sm:$0xff]
      %v302 = vld [vmem:[%s219 + $0x30] sm:$0xff]
      %v303 = vld [vmem:[%s219 + $0x38] sm:$0xff]
      %v304 = vpack.c.bf16 %v297, %v296
      %v305 = vpack.c.bf16 %v299, %v298
      %v306 = vpack.c.bf16 %v301, %v300
      %v307 = vpack.c.bf16 %v303, %v302
      %309 = vset.pattern.permute.xlu0 0
      %310 = vperm.xlu0 %309, %v251
      %v311 = vpop.permute.xlu0 %310
      %314 = vset.pattern.permute.xlu0 0
      %315 = vperm.xlu0 %314, %v252
      %v316 = vpop.permute.xlu0 %315
      %319 = vset.pattern.permute.xlu0 0
      %320 = vperm.xlu0 %319, %v253
      %v321 = vpop.permute.xlu0 %320
      %324 = vset.pattern.permute.xlu0 0
      %325 = vperm.xlu0 %324, %v254
      %v326 = vpop.permute.xlu0 %325
      %329 = vset.pattern.permute.xlu0 0
      %330 = vperm.xlu0 %329, %v255
      %v331 = vpop.permute.xlu0 %330
      %334 = vset.pattern.permute.xlu0 0
      %335 = vperm.xlu0 %334, %v256
      %v336 = vpop.permute.xlu0 %335
      %339 = vset.pattern.permute.xlu0 0
      %340 = vperm.xlu0 %339, %v257
      %v341 = vpop.permute.xlu0 %340
      %344 = vset.pattern.permute.xlu0 0
      %345 = vperm.xlu0 %344, %v258
      %v346 = vpop.permute.xlu0 %345
      %349 = vset.pattern.permute.xlu0 0
      %350 = vperm.xlu0 %349, %v259
      %v351 = vpop.permute.xlu0 %350
      %354 = vset.pattern.permute.xlu0 0
      %355 = vperm.xlu0 %354, %v260
      %v356 = vpop.permute.xlu0 %355
      %359 = vset.pattern.permute.xlu0 0
      %360 = vperm.xlu0 %359, %v261
      %v361 = vpop.permute.xlu0 %360
      %364 = vset.pattern.permute.xlu0 0
      %365 = vperm.xlu0 %364, %v262
      %v366 = vpop.permute.xlu0 %365
      %369 = vset.pattern.permute.xlu0 0
      %370 = vperm.xlu0 %369, %v263
      %v371 = vpop.permute.xlu0 %370
      %374 = vset.pattern.permute.xlu0 0
      %375 = vperm.xlu0 %374, %v264
      %v376 = vpop.permute.xlu0 %375
      %379 = vset.pattern.permute.xlu0 0
      %380 = vperm.xlu0 %379, %v265
      %v381 = vpop.permute.xlu0 %380
      %384 = vset.pattern.permute.xlu0 0
      %385 = vperm.xlu0 %384, %v266
      %v386 = vpop.permute.xlu0 %385
      %v404 = vunpack.c.l.b16 %v226
      %v405 = vunpack.c.l.b16 %v227
      %v406 = vunpack.c.l.b16 %v228
      %v407 = vunpack.c.l.b16 %v229
      %v408 = vunpack.c.l.b16 %v230
      %v409 = vunpack.c.l.b16 %v231
      %v410 = vunpack.c.l.b16 %v232
      %v411 = vunpack.c.l.b16 %v233
      %v412 = vunpack.c.l.b16 %v234
      %v413 = vunpack.c.l.b16 %v235
      %v414 = vunpack.c.l.b16 %v236
      %v415 = vunpack.c.l.b16 %v237
      %v416 = vunpack.c.l.b16 %v238
      %v417 = vunpack.c.l.b16 %v239
      %v418 = vunpack.c.l.b16 %v240
      %v419 = vunpack.c.l.b16 %v241
      %v420 = vpack.c.b16 %v405, %v404
      %v421 = vpack.c.b16 %v407, %v406
      %v422 = vpack.c.b16 %v409, %v408
      %v423 = vpack.c.b16 %v411, %v410
      %v424 = vpack.c.b16 %v413, %v412
      %v425 = vpack.c.b16 %v415, %v414
      %v426 = vpack.c.b16 %v417, %v416
      %v427 = vpack.c.b16 %v419, %v418
      %vm428 = vcmask 523264
      %v430 = vsel %vm428, %v420, 0
      %v433 = vsel %vm428, %v421, 0
      %v436 = vsel %vm428, %v422, 0
      %v439 = vsel %vm428, %v423, 0
      %v442 = vsel %vm428, %v424, 0
      %v445 = vsel %vm428, %v425, 0
      %v448 = vsel %vm428, %v426, 0
      %v451 = vsel %vm428, %v427, 0
      %453 = vmatpush.bf16.msra.mxu0 0
      %454 = vmatpush.bf16.msra.mxu0 0
      %455 = vmatpush.bf16.msra.mxu0 0
      %456 = vmatpush.bf16.msra.mxu0 0
      %457 = vmatpush.bf16.msra.mxu0 %v307
      %458 = vmatpush.bf16.msra.mxu0 %v306
      %459 = vmatpush.bf16.msra.mxu0 %v305
      %460 = vmatpush.bf16.msra.mxu0 %v304
      %461 = vmatmul.bf16.gmra.mxu0 %v430
      %v462 = vpop.f32.mrf.mxu0
      %v463 = vadd.f32 %v311, %v462
      %v464 = vpop.f32.mrf.mxu0
      %v465 = vadd.f32 %v316, %v464
      %466 = vmatmul.bf16.gmra.mxu0 %v433
      %v467 = vpop.f32.mrf.mxu0
      %v468 = vadd.f32 %v321, %v467
      %v469 = vpop.f32.mrf.mxu0
      %v470 = vadd.f32 %v326, %v469
      %471 = vmatmul.bf16.gmra.mxu0 %v436
      %v472 = vpop.f32.mrf.mxu0
      %v473 = vadd.f32 %v331, %v472
      %v474 = vpop.f32.mrf.mxu0
      %v475 = vadd.f32 %v336, %v474
      %476 = vmatmul.bf16.gmra.mxu0 %v439
      %v477 = vpop.f32.mrf.mxu0
      %v478 = vadd.f32 %v341, %v477
      %v479 = vpop.f32.mrf.mxu0
      %v480 = vadd.f32 %v346, %v479
      %481 = vmatmul.bf16.gmra.mxu0 %v442
      %v482 = vpop.f32.mrf.mxu0
      %v483 = vadd.f32 %v351, %v482
      %v484 = vpop.f32.mrf.mxu0
      %v485 = vadd.f32 %v356, %v484
      %486 = vmatmul.bf16.gmra.mxu0 %v445
      %v487 = vpop.f32.mrf.mxu0
      %v488 = vadd.f32 %v361, %v487
      %v489 = vpop.f32.mrf.mxu0
      %v490 = vadd.f32 %v366, %v489
      %491 = vmatmul.bf16.gmra.mxu0 %v448
      %v492 = vpop.f32.mrf.mxu0
      %v493 = vadd.f32 %v371, %v492
      %v494 = vpop.f32.mrf.mxu0
      %v495 = vadd.f32 %v376, %v494
      %496 = vmatmul.bf16.gmra.mxu0 %v451
      %v497 = vpop.f32.mrf.mxu0
      %v498 = vadd.f32 %v381, %v497
      %v499 = vpop.f32.mrf.mxu0
      %v500 = vadd.f32 %v386, %v499
      %501 = vdwg.mxu0
      %vm502 = vcmp.gt.f32.partialorder %v463, 0.0
      %vm503 = vcmp.gt.f32.partialorder %v465, 0.0
      %vm504 = vcmp.gt.f32.partialorder %v468, 0.0
      %vm505 = vcmp.gt.f32.partialorder %v470, 0.0
      %vm506 = vcmp.gt.f32.partialorder %v473, 0.0
      %vm507 = vcmp.gt.f32.partialorder %v475, 0.0
      %vm508 = vcmp.gt.f32.partialorder %v478, 0.0
      %vm509 = vcmp.gt.f32.partialorder %v480, 0.0
      %vm510 = vcmp.gt.f32.partialorder %v483, 0.0
      %vm511 = vcmp.gt.f32.partialorder %v485, 0.0
      %vm512 = vcmp.gt.f32.partialorder %v488, 0.0
      %vm513 = vcmp.gt.f32.partialorder %v490, 0.0
      %vm514 = vcmp.gt.f32.partialorder %v493, 0.0
      %vm515 = vcmp.gt.f32.partialorder %v495, 0.0
      %vm516 = vcmp.gt.f32.partialorder %v498, 0.0
      %vm517 = vcmp.gt.f32.partialorder %v500, 0.0
      %v518 = vmul.f32 %v463, 0.01
      %v519 = vmul.f32 %v465, 0.01
      %v520 = vmul.f32 %v468, 0.01
      %v521 = vmul.f32 %v470, 0.01
      %v522 = vmul.f32 %v473, 0.01
      %v523 = vmul.f32 %v475, 0.01
      %v524 = vmul.f32 %v478, 0.01
      %v525 = vmul.f32 %v480, 0.01
      %v526 = vmul.f32 %v483, 0.01
      %v527 = vmul.f32 %v485, 0.01
      %v528 = vmul.f32 %v488, 0.01
      %v529 = vmul.f32 %v490, 0.01
      %v530 = vmul.f32 %v493, 0.01
      %v531 = vmul.f32 %v495, 0.01
      %v532 = vmul.f32 %v498, 0.01
      %v533 = vmul.f32 %v500, 0.01
      %v534 = vsel %vm502, %v463, %v518
      %v535 = vsel %vm503, %v465, %v519
      %v536 = vsel %vm504, %v468, %v520
      %v537 = vsel %vm505, %v470, %v521
      %v538 = vsel %vm506, %v473, %v522
      %v539 = vsel %vm507, %v475, %v523
      %v540 = vsel %vm508, %v478, %v524
      %v541 = vsel %vm509, %v480, %v525
      %v542 = vsel %vm510, %v483, %v526
      %v543 = vsel %vm511, %v485, %v527
      %v544 = vsel %vm512, %v488, %v528
      %v545 = vsel %vm513, %v490, %v529
      %v546 = vsel %vm514, %v493, %v530
      %v547 = vsel %vm515, %v495, %v531
      %v548 = vsel %vm516, %v498, %v532
      %v549 = vsel %vm517, %v500, %v533
      %v550 = vpack.c.bf16 %v535, %v534
      %v551 = vpack.c.bf16 %v537, %v536
      %v552 = vpack.c.bf16 %v539, %v538
      %v553 = vpack.c.bf16 %v541, %v540
      %v554 = vpack.c.bf16 %v543, %v542
      %v555 = vpack.c.bf16 %v545, %v544
      %v556 = vpack.c.bf16 %v547, %v546
      %v557 = vpack.c.bf16 %v549, %v548
      %559 = vset.pattern.permute.xlu0 0
      %560 = vperm.xlu0 %559, %v267
      %v561 = vpop.permute.xlu0 %560
      %564 = vset.pattern.permute.xlu0 0
      %565 = vperm.xlu0 %564, %v268
      %v566 = vpop.permute.xlu0 %565
      %569 = vset.pattern.permute.xlu0 0
      %570 = vperm.xlu0 %569, %v269
      %v571 = vpop.permute.xlu0 %570
      %574 = vset.pattern.permute.xlu0 0
      %575 = vperm.xlu0 %574, %v270
      %v576 = vpop.permute.xlu0 %575
      %579 = vset.pattern.permute.xlu0 0
      %580 = vperm.xlu0 %579, %v271
      %v581 = vpop.permute.xlu0 %580
      %584 = vset.pattern.permute.xlu0 0
      %585 = vperm.xlu0 %584, %v272
      %v586 = vpop.permute.xlu0 %585
      %589 = vset.pattern.permute.xlu0 0
      %590 = vperm.xlu0 %589, %v273
      %v591 = vpop.permute.xlu0 %590
      %594 = vset.pattern.permute.xlu0 0
      %595 = vperm.xlu0 %594, %v274
      %v596 = vpop.permute.xlu0 %595
      %599 = vset.pattern.permute.xlu0 0
      %600 = vperm.xlu0 %599, %v275
      %v601 = vpop.permute.xlu0 %600
      %v612 = vunpack.c.l.b16 %v242
      %v613 = vunpack.c.l.b16 %v243
      %v614 = vunpack.c.l.b16 %v244
      %v615 = vunpack.c.l.b16 %v245
      %v616 = vunpack.c.l.b16 %v246
      %v617 = vunpack.c.l.b16 %v247
      %v618 = vunpack.c.l.b16 %v248
      %v619 = vunpack.c.l.b16 %v249
      %v620 = vunpack.c.l.b16 %v250
      %v621 = vpack.c.b16 %v613, %v612
      %v622 = vpack.c.b16 %v615, %v614
      %v623 = vpack.c.b16 %v617, %v616
      %v624 = vpack.c.b16 %v619, %v618
      %v625 = vpack.c.b16 %v620, %v620
      %631 = vmatpush.bf16.msra.mxu0 %v557
      %632 = vmatpush.bf16.msra.mxu0 %v556
      %633 = vmatpush.bf16.msra.mxu0 %v555
      %634 = vmatpush.bf16.msra.mxu0 %v554
      %635 = vmatpush.bf16.msra.mxu0 %v553
      %636 = vmatpush.bf16.msra.mxu0 %v552
      %637 = vmatpush.bf16.msra.mxu0 %v551
      %638 = vmatpush.bf16.msra.mxu0 %v550
      %639 = vmatmul.bf16.gmra.mxu0 %v621
      %v640 = vpop.f32.mrf.mxu0
      %v641 = vadd.f32 %v561, %v640
      %v642 = vpop.f32.mrf.mxu0
      %v643 = vadd.f32 %v566, %v642
      %644 = vmatmul.bf16.gmra.mxu0 %v622
      %v645 = vpop.f32.mrf.mxu0
      %v646 = vadd.f32 %v571, %v645
      %v647 = vpop.f32.mrf.mxu0
      %v648 = vadd.f32 %v576, %v647
      %649 = vmatmul.bf16.gmra.mxu0 %v623
      %v650 = vpop.f32.mrf.mxu0
      %v651 = vadd.f32 %v581, %v650
      %v652 = vpop.f32.mrf.mxu0
      %v653 = vadd.f32 %v586, %v652
      %654 = vmatmul.bf16.gmra.mxu0 %v624
      %v655 = vpop.f32.mrf.mxu0
      %v656 = vadd.f32 %v591, %v655
      %v657 = vpop.f32.mrf.mxu0
      %v658 = vadd.f32 %v596, %v657
      %659 = vmatmul.bf16.gmra.mxu0 %v625
      %v660 = vpop.f32.mrf.mxu0
      %v661 = vadd.f32 %v601, %v660
      %v662 = vpop.f32.mrf.mxu0
      %663 = vdwg.mxu0
      %v664 = vxor.u32 %v641, 2147483648
      %v665 = vxor.u32 %v643, 2147483648
      %v666 = vxor.u32 %v646, 2147483648
      %v667 = vxor.u32 %v648, 2147483648
      %v668 = vxor.u32 %v651, 2147483648
      %v669 = vxor.u32 %v653, 2147483648
      %v670 = vxor.u32 %v656, 2147483648
      %v671 = vxor.u32 %v658, 2147483648
      %v672 = vxor.u32 %v661, 2147483648
      %v673 = vmul.f32 %v664, 1.442695
      %v674 = vpow.pop %v673
      %v675 = vmul.f32 %v665, 1.442695
      %v676 = vpow.pop %v675
      %v677 = vmul.f32 %v666, 1.442695
      %v678 = vpow.pop %v677
      %v679 = vmul.f32 %v667, 1.442695
      %v680 = vpow.pop %v679
      %v681 = vmul.f32 %v668, 1.442695
      %v682 = vpow.pop %v681
      %v683 = vmul.f32 %v669, 1.442695
      %v684 = vpow.pop %v683
      %v685 = vmul.f32 %v670, 1.442695
      %v686 = vpow.pop %v685
      %v687 = vmul.f32 %v671, 1.442695
      %v688 = vpow.pop %v687
      %v689 = vmul.f32 %v672, 1.442695
      %v690 = vpow.pop %v689
      %v691 = vadd.f32 %v674, 1.0
      %v692 = vadd.f32 %v676, 1.0
      %v693 = vadd.f32 %v678, 1.0
      %v694 = vadd.f32 %v680, 1.0
      %v695 = vadd.f32 %v682, 1.0
      %v696 = vadd.f32 %v684, 1.0
      %v697 = vadd.f32 %v686, 1.0
      %v698 = vadd.f32 %v688, 1.0
      %v699 = vadd.f32 %v690, 1.0
      %v700 = vrcp.pop %v691
      %v701 = vmul.f32 %v691, %v700
      %v702 = vsub.f32 1.0, %v701
      %v703 = vmul.f32 %v700, %v702
      %v704 = vadd.f32 %v700, %v703
      %vm705 = vweird.f32 %v691
      %vm706 = vweird.f32 %v700
      %vm707 = vmor %vm705, %vm706
      %v708 = vsel %vm707, %v700, %v704
      %v709 = vand.u32 2147483647, %v691
      %vm710 = vcmp.eq.f32.partialorder %v709, 8.507059e+37
      %v711 = vand.u32 %v691, 2147483648
      %v712 = vor.u32 1.1754944e-38, %v711
      %v713 = vsel %vm710, %v712, %v708
      %v714 = vmul.f32 1.0, %v713
      %v715 = vrcp.pop %v692
      %v716 = vmul.f32 %v692, %v715
      %v717 = vsub.f32 1.0, %v716
      %v718 = vmul.f32 %v715, %v717
      %v719 = vadd.f32 %v715, %v718
      %vm720 = vweird.f32 %v692
      %vm721 = vweird.f32 %v715
      %vm722 = vmor %vm720, %vm721
      %v723 = vsel %vm722, %v715, %v719
      %v724 = vand.u32 2147483647, %v692
      %vm725 = vcmp.eq.f32.partialorder %v724, 8.507059e+37
      %v726 = vand.u32 %v692, 2147483648
      %v727 = vor.u32 1.1754944e-38, %v726
      %v728 = vsel %vm725, %v727, %v723
      %v729 = vmul.f32 1.0, %v728
      %v730 = vrcp.pop %v693
      %v731 = vmul.f32 %v693, %v730
      %v732 = vsub.f32 1.0, %v731
      %v733 = vmul.f32 %v730, %v732
      %v734 = vadd.f32 %v730, %v733
      %vm735 = vweird.f32 %v693
      %vm736 = vweird.f32 %v730
      %vm737 = vmor %vm735, %vm736
      %v738 = vsel %vm737, %v730, %v734
      %v739 = vand.u32 2147483647, %v693
      %vm740 = vcmp.eq.f32.partialorder %v739, 8.507059e+37
      %v741 = vand.u32 %v693, 2147483648
      %v742 = vor.u32 1.1754944e-38, %v741
      %v743 = vsel %vm740, %v742, %v738
      %v744 = vmul.f32 1.0, %v743
      %v745 = vrcp.pop %v694
      %v746 = vmul.f32 %v694, %v745
      %v747 = vsub.f32 1.0, %v746
      %v748 = vmul.f32 %v745, %v747
      %v749 = vadd.f32 %v745, %v748
      %vm750 = vweird.f32 %v694
      %vm751 = vweird.f32 %v745
      %vm752 = vmor %vm750, %vm751
      %v753 = vsel %vm752, %v745, %v749
      %v754 = vand.u32 2147483647, %v694
      %vm755 = vcmp.eq.f32.partialorder %v754, 8.507059e+37
      %v756 = vand.u32 %v694, 2147483648
      %v757 = vor.u32 1.1754944e-38, %v756
      %v758 = vsel %vm755, %v757, %v753
      %v759 = vmul.f32 1.0, %v758
      %v760 = vrcp.pop %v695
      %v761 = vmul.f32 %v695, %v760
      %v762 = vsub.f32 1.0, %v761
      %v763 = vmul.f32 %v760, %v762
      %v764 = vadd.f32 %v760, %v763
      %vm765 = vweird.f32 %v695
      %vm766 = vweird.f32 %v760
      %vm767 = vmor %vm765, %vm766
      %v768 = vsel %vm767, %v760, %v764
      %v769 = vand.u32 2147483647, %v695
      %vm770 = vcmp.eq.f32.partialorder %v769, 8.507059e+37
      %v771 = vand.u32 %v695, 2147483648
      %v772 = vor.u32 1.1754944e-38, %v771
      %v773 = vsel %vm770, %v772, %v768
      %v774 = vmul.f32 1.0, %v773
      %v775 = vrcp.pop %v696
      %v776 = vmul.f32 %v696, %v775
      %v777 = vsub.f32 1.0, %v776
      %v778 = vmul.f32 %v775, %v777
      %v779 = vadd.f32 %v775, %v778
      %vm780 = vweird.f32 %v696
      %vm781 = vweird.f32 %v775
      %vm782 = vmor %vm780, %vm781
      %v783 = vsel %vm782, %v775, %v779
      %v784 = vand.u32 2147483647, %v696
      %vm785 = vcmp.eq.f32.partialorder %v784, 8.507059e+37
      %v786 = vand.u32 %v696, 2147483648
      %v787 = vor.u32 1.1754944e-38, %v786
      %v788 = vsel %vm785, %v787, %v783
      %v789 = vmul.f32 1.0, %v788
      %v790 = vrcp.pop %v697
      %v791 = vmul.f32 %v697, %v790
      %v792 = vsub.f32 1.0, %v791
      %v793 = vmul.f32 %v790, %v792
      %v794 = vadd.f32 %v790, %v793
      %vm795 = vweird.f32 %v697
      %vm796 = vweird.f32 %v790
      %vm797 = vmor %vm795, %vm796
      %v798 = vsel %vm797, %v790, %v794
      %v799 = vand.u32 2147483647, %v697
      %vm800 = vcmp.eq.f32.partialorder %v799, 8.507059e+37
      %v801 = vand.u32 %v697, 2147483648
      %v802 = vor.u32 1.1754944e-38, %v801
      %v803 = vsel %vm800, %v802, %v798
      %v804 = vmul.f32 1.0, %v803
      %v805 = vrcp.pop %v698
      %v806 = vmul.f32 %v698, %v805
      %v807 = vsub.f32 1.0, %v806
      %v808 = vmul.f32 %v805, %v807
      %v809 = vadd.f32 %v805, %v808
      %vm810 = vweird.f32 %v698
      %vm811 = vweird.f32 %v805
      %vm812 = vmor %vm810, %vm811
      %v813 = vsel %vm812, %v805, %v809
      %v814 = vand.u32 2147483647, %v698
      %vm815 = vcmp.eq.f32.partialorder %v814, 8.507059e+37
      %v816 = vand.u32 %v698, 2147483648
      %v817 = vor.u32 1.1754944e-38, %v816
      %v818 = vsel %vm815, %v817, %v813
      %v819 = vmul.f32 1.0, %v818
      %v820 = vrcp.pop %v699
      %v821 = vmul.f32 %v699, %v820
      %v822 = vsub.f32 1.0, %v821
      %v823 = vmul.f32 %v820, %v822
      %v824 = vadd.f32 %v820, %v823
      %vm825 = vweird.f32 %v699
      %vm826 = vweird.f32 %v820
      %vm827 = vmor %vm825, %vm826
      %v828 = vsel %vm827, %v820, %v824
      %v829 = vand.u32 2147483647, %v699
      %vm830 = vcmp.eq.f32.partialorder %v829, 8.507059e+37
      %v831 = vand.u32 %v699, 2147483648
      %v832 = vor.u32 1.1754944e-38, %v831
      %v833 = vsel %vm830, %v832, %v828
      %v834 = vmul.f32 1.0, %v833
      %v835 = vsub.f32 %v714, %v641
      %v836 = vsub.f32 %v729, %v643
      %v837 = vsub.f32 %v744, %v646
      %v838 = vsub.f32 %v759, %v648
      %v839 = vsub.f32 %v774, %v651
      %v840 = vsub.f32 %v789, %v653
      %v841 = vsub.f32 %v804, %v656
      %v842 = vsub.f32 %v819, %v658
      %v843 = vsub.f32 %v834, %v661
      %845 = vset.pattern.permute.xlu0 0
      %846 = vperm.xlu0 %845, %v277
      %v847 = vpop.permute.xlu0 %846
      %850 = vset.pattern.permute.xlu0 0
      %851 = vperm.xlu0 %850, %v278
      %v852 = vpop.permute.xlu0 %851
      %855 = vset.pattern.permute.xlu0 0
      %856 = vperm.xlu0 %855, %v279
      %v857 = vpop.permute.xlu0 %856
      %860 = vset.pattern.permute.xlu0 0
      %861 = vperm.xlu0 %860, %v280
      %v862 = vpop.permute.xlu0 %861
      %865 = vset.pattern.permute.xlu0 0
      %866 = vperm.xlu0 %865, %v281
      %v867 = vpop.permute.xlu0 %866
      %870 = vset.pattern.permute.xlu0 0
      %871 = vperm.xlu0 %870, %v282
      %v872 = vpop.permute.xlu0 %871
      %875 = vset.pattern.permute.xlu0 0
      %876 = vperm.xlu0 %875, %v283
      %v877 = vpop.permute.xlu0 %876
      %880 = vset.pattern.permute.xlu0 0
      %881 = vperm.xlu0 %880, %v284
      %v882 = vpop.permute.xlu0 %881
      %885 = vset.pattern.permute.xlu0 0
      %886 = vperm.xlu0 %885, %v285
      %v887 = vpop.permute.xlu0 %886
      %v889 = vmul.f32 %v847, %v835
      %v890 = vmul.f32 %v852, %v836
      %v891 = vmul.f32 %v857, %v837
      %v892 = vmul.f32 %v862, %v838
      %v893 = vmul.f32 %v867, %v839
      %v894 = vmul.f32 %v872, %v840
      %v895 = vmul.f32 %v877, %v841
      %v896 = vmul.f32 %v882, %v842
      %v897 = vmul.f32 %v887, %v843
      %v898 = vadd.f32 %v641, %v889
      %v899 = vadd.f32 %v643, %v890
      %v900 = vadd.f32 %v646, %v891
      %v901 = vadd.f32 %v648, %v892
      %v902 = vadd.f32 %v651, %v893
      %v903 = vadd.f32 %v653, %v894
      %v904 = vadd.f32 %v656, %v895
      %v905 = vadd.f32 %v658, %v896
      %v906 = vadd.f32 %v661, %v897
      %908 = vset.pattern.permute.xlu0 0
      %909 = vperm.xlu0 %908, %v287
      %v910 = vpop.permute.xlu0 %909
      %913 = vset.pattern.permute.xlu0 0
      %914 = vperm.xlu0 %913, %v288
      %v915 = vpop.permute.xlu0 %914
      %918 = vset.pattern.permute.xlu0 0
      %919 = vperm.xlu0 %918, %v289
      %v920 = vpop.permute.xlu0 %919
      %923 = vset.pattern.permute.xlu0 0
      %924 = vperm.xlu0 %923, %v290
      %v925 = vpop.permute.xlu0 %924
      %928 = vset.pattern.permute.xlu0 0
      %929 = vperm.xlu0 %928, %v291
      %v930 = vpop.permute.xlu0 %929
      %933 = vset.pattern.permute.xlu0 0
      %934 = vperm.xlu0 %933, %v292
      %v935 = vpop.permute.xlu0 %934
      %938 = vset.pattern.permute.xlu0 0
      %939 = vperm.xlu0 %938, %v293
      %v940 = vpop.permute.xlu0 %939
      %943 = vset.pattern.permute.xlu0 0
      %944 = vperm.xlu0 %943, %v294
      %v945 = vpop.permute.xlu0 %944
      %948 = vset.pattern.permute.xlu0 0
      %949 = vperm.xlu0 %948, %v295
      %v950 = vpop.permute.xlu0 %949
      %v952 = vadd.f32 %v898, %v910
      %v953 = vadd.f32 %v899, %v915
      %v954 = vadd.f32 %v900, %v920
      %v955 = vadd.f32 %v901, %v925
      %v956 = vadd.f32 %v902, %v930
      %v957 = vadd.f32 %v903, %v935
      %v958 = vadd.f32 %v904, %v940
      %v959 = vadd.f32 %v905, %v945
      %v960 = vadd.f32 %v906, %v950
      %vm961 = vcmask 400384
      %962 = vst.msk [vmem:[%s224] sm:$0xff] %vm961, %v952
      %963 = vst.msk [vmem:[%s224 + $0x8] sm:$0xff] %vm961, %v953
      %964 = vst.msk [vmem:[%s224 + $0x10] sm:$0xff] %vm961, %v954
      %965 = vst.msk [vmem:[%s224 + $0x18] sm:$0xff] %vm961, %v955
      %966 = vst.msk [vmem:[%s224 + $0x20] sm:$0xff] %vm961, %v956
      %967 = vst.msk [vmem:[%s224 + $0x28] sm:$0xff] %vm961, %v957
      %968 = vst.msk [vmem:[%s224 + $0x30] sm:$0xff] %vm961, %v958
      %969 = vst.msk [vmem:[%s224 + $0x38] sm:$0xff] %vm961, %v959
      %vm970 = vcmask 393216
      %971 = vst.msk [vmem:[%s224 + $0x40] sm:$0x1] %vm970, %v960
      %p972 = scmp.lt.s32.totalorder %s16, 1
      %s973 = scalar_select %p972, %s16, 1
      %s974 = smul.addr %s973, 9
      %s975 = smul.addr %s974, 8
      %s976 = scalar_lea.vmem %s5, %s975
      // Predicated region
      $region41: #{tpu_custom_call.1} parent=39 // pred_check
        %p977 = pneg %p144
      $region42: #{tpu_custom_call.1} parent=39 // pred_check_branch
        %979 = sbr.rel (%p977) target = $region44
      $region43: #{tpu_custom_call.1} parent=39 // pred_region
        _
      $region44: #{tpu_custom_call.1} parent=39 // pred_fallthru
        _
    $region40: #{tpu_custom_call.1} parent=5 // pred_fallthru
      _
    %p980 = scmp.le.s32.totalorder 2, %s11
    // Predicated region
    $region45: #{tpu_custom_call.1} parent=5 // pred_check
      %p981 = pneg %p980
    $region46: #{tpu_custom_call.1} parent=5 // pred_check_branch
      %983 = sbr.rel (%p981) target = $region48
    $region47: #{tpu_custom_call.1} parent=5 // pred_region
      %s984 = ssub.s32 %s11, 2
      // Predicated region
      $region49: #{tpu_custom_call.1} parent=47 // pred_check
        %p985 = pneg %p150
      $region50: #{tpu_custom_call.1} parent=47 // pred_check_branch
        %987 = sbr.rel (%p985) target = $region52
      $region51: #{tpu_custom_call.1} parent=47 // pred_region
        %p988 = scmp.lt.s32.totalorder %s17, 1
        %s989 = scalar_select %p988, %s17, 1
        %s990 = smul.addr %s989, 9
        %s991 = smul.addr %s990, 8
        %s992 = scalar_lea.vmem %s5, %s991
      $region52: #{tpu_custom_call.1} parent=47 // pred_fallthru
        _
    $region48: #{tpu_custom_call.1} parent=5 // pred_fallthru
      _
  $region6: #{tpu_custom_call.1} parent=0 // loop_footer
    %s15 = sadd.s32 1, %s11
  $region7: #{tpu_custom_call.1} parent=0 // loop_footer_branch
    %10 = sbr.rel target = $region3
  $region8: #{tpu_custom_call.1} parent=0 // loop_exit
    _

</llo_original>
